<compile_context>
chip_gen: v7x
topology: tpu7x:2x2x1
jax: 0.10.0
libtpu: 0.0.40
codegen_flags: <defaults>
</compile_context>

<pallas_src>
import math
import jax
import jax.numpy as jnp
from jax.experimental import pallas as pl
from jax.experimental.pallas import tpu as pltpu


_COMPUTE_DTYPE = jnp.bfloat16      # MXU-native; accumulation stays f32.
_VMEM_LIMIT = 48 * 1024 * 1024     # explicit budget; safe on v7x (64 MiB VMEM).


def _round_up(n, m):
    return ((n + m - 1) // m) * m


def _pick_tile(n, tm):
    """Largest multiple-of-8 row tile <= tm (whole N when N is small)."""
    return min(tm, _round_up(n, 8))


# ----------------------------------------------------------------------------
# Kernel 1: _LoRA_qkv forward  (base qkv + fused 3+3 LoRA adapters)
# ----------------------------------------------------------------------------
def _lora_qkv_kernel(x_ref, wqkv_ref, bias_ref, a_ref, b_ref, out_ref):
    x = x_ref[...]                                               # (tm, dim) bf16
    # frozen base projection
    qkv = jnp.dot(x, wqkv_ref[...], preferred_element_type=jnp.float32)
    # fused LoRA path: one [tm,dim]x[dim,6r] then one [tm,6r]x[6r,3*dim]
    xa = jnp.dot(x, a_ref[...], preferred_element_type=jnp.float32)
    lora = jnp.dot(xa.astype(x.dtype), b_ref[...],
                   preferred_element_type=jnp.float32)
    # single lane-dense store (q/v offsets are already baked into b_ref)
    out_ref[...] = (qkv + lora + bias_ref[...]).astype(out_ref.dtype)


def lora_qkv(x, wqkv_t, bias, aq, bq, av, bv, *, tm=256):
    """x: [B,H,W,dim]; wqkv_t: [dim,3*dim]; bias: [3*dim];
    aq/av: [3,dim,r]; bq/bv: [3,r,dim]  ->  [B,H,W,3*dim]."""
    B, H, W, dim = x.shape
    r = aq.shape[-1]
    N = B * H * W
    tm_eff = _pick_tile(N, tm)
    n_pad = _round_up(N, tm_eff)

    # Pack the 3 q-adapters and 3 v-adapters into one matmul pair:
    #   a_cat : [dim, 6r] = [Aq1|Aq2|Aq3|Av1|Av2|Av3]
    #   b_cat : [6r, 3*dim], q rows -> cols [0:dim], v rows -> cols [2dim:3dim]
    a_cat = jnp.concatenate(
        [jnp.transpose(aq, (1, 0, 2)).reshape(dim, 3 * r),
         jnp.transpose(av, (1, 0, 2)).reshape(dim, 3 * r)], axis=1)
    bq_cat = bq.reshape(3 * r, dim)
    bv_cat = bv.reshape(3 * r, dim)
    zeros = jnp.zeros((3 * r, dim), bq_cat.dtype)
    b_cat = jnp.concatenate(
        [jnp.concatenate([bq_cat, zeros, zeros], axis=1),
         jnp.concatenate([zeros, zeros, bv_cat], axis=1)], axis=0)

    x2 = x.reshape(N, dim)
    if n_pad != N:
        x2 = jnp.pad(x2, ((0, n_pad - N), (0, 0)))

    x2 = x2.astype(_COMPUTE_DTYPE)
    wq = wqkv_t.astype(_COMPUTE_DTYPE)
    a_cat = a_cat.astype(_COMPUTE_DTYPE)
    b_cat = b_cat.astype(_COMPUTE_DTYPE)
    bias2 = bias.reshape(1, 3 * dim).astype(jnp.float32)

    out = pl.pallas_call(
        _lora_qkv_kernel,
        out_shape=jax.ShapeDtypeStruct((n_pad, 3 * dim), x.dtype),
        grid_spec=pltpu.PrefetchScalarGridSpec(
            num_scalar_prefetch=0,
            grid=(n_pad // tm_eff,),
            in_specs=[
                pl.BlockSpec((tm_eff, dim), lambda i: (i, 0)),
                pl.BlockSpec((dim, 3 * dim), lambda i: (0, 0)),
                pl.BlockSpec((1, 3 * dim), lambda i: (0, 0)),
                pl.BlockSpec((dim, 6 * r), lambda i: (0, 0)),
                pl.BlockSpec((6 * r, 3 * dim), lambda i: (0, 0)),
            ],
            out_specs=pl.BlockSpec((tm_eff, 3 * dim), lambda i: (i, 0)),
        ),
        compiler_params=pltpu.CompilerParams(
            dimension_semantics=("parallel",),
            vmem_limit_bytes=_VMEM_LIMIT),
    )(x2, wq, bias2, a_cat, b_cat)
    if n_pad != N:
        out = out[:N]
    return out.reshape(B, H, W, 3 * dim)


# ----------------------------------------------------------------------------
# Kernel 2: 3-layer MLP (Linear -> ReLU -> Linear -> ReLU -> Linear)
# ----------------------------------------------------------------------------
def _mlp3_kernel(x_ref, w1_ref, b1_ref, w2_ref, b2_ref, w3_ref, b3_ref, out_ref):
    cdt = w1_ref.dtype
    h = jnp.dot(x_ref[...], w1_ref[...],
                preferred_element_type=jnp.float32) + b1_ref[...]
    h = jnp.maximum(h, 0.0).astype(cdt)
    h = jnp.dot(h, w2_ref[...],
                preferred_element_type=jnp.float32) + b2_ref[...]
    h = jnp.maximum(h, 0.0).astype(cdt)
    h = jnp.dot(h, w3_ref[...],
                preferred_element_type=jnp.float32) + b3_ref[...]
    out_ref[...] = h.astype(out_ref.dtype)


def mlp3(x, w1, b1, w2, b2, w3, b3, *, tm=256):
    """x: [N, d_in]; w*: [in, out] (already transposed); b*: [out]."""
    N, d_in = x.shape
    h1, h2, d_out = w1.shape[1], w2.shape[1], w3.shape[1]
    tm_eff = _pick_tile(N, tm)
    n_pad = _round_up(N, tm_eff)
    xp = x if n_pad == N else jnp.pad(x, ((0, n_pad - N), (0, 0)))

    out = pl.pallas_call(
        _mlp3_kernel,
        out_shape=jax.ShapeDtypeStruct((n_pad, d_out), x.dtype),
        grid_spec=pltpu.PrefetchScalarGridSpec(
            num_scalar_prefetch=0,
            grid=(n_pad // tm_eff,),
            in_specs=[
                pl.BlockSpec((tm_eff, d_in), lambda i: (i, 0)),
                pl.BlockSpec((d_in, h1), lambda i: (0, 0)),
                pl.BlockSpec((1, h1), lambda i: (0, 0)),
                pl.BlockSpec((h1, h2), lambda i: (0, 0)),
                pl.BlockSpec((1, h2), lambda i: (0, 0)),
                pl.BlockSpec((h2, d_out), lambda i: (0, 0)),
                pl.BlockSpec((1, d_out), lambda i: (0, 0)),
            ],
            out_specs=pl.BlockSpec((tm_eff, d_out), lambda i: (i, 0)),
        ),
        compiler_params=pltpu.CompilerParams(
            dimension_semantics=("parallel",),
            vmem_limit_bytes=_VMEM_LIMIT),
    )(xp.astype(_COMPUTE_DTYPE),
      w1.astype(_COMPUTE_DTYPE), b1.reshape(1, -1).astype(jnp.float32),
      w2.astype(_COMPUTE_DTYPE), b2.reshape(1, -1).astype(jnp.float32),
      w3.astype(_COMPUTE_DTYPE), b3.reshape(1, -1).astype(jnp.float32))
    return out[:N] if n_pad != N else out


# ----------------------------------------------------------------------------
# Kernel 3: linear_fuse — 1x1 Conv2d as a channel matmul, NHWC end-to-end
# ----------------------------------------------------------------------------
def _conv1x1_kernel(x_ref, w_ref, b_ref, out_ref):
    out_ref[...] = (jnp.dot(x_ref[...], w_ref[...],
                            preferred_element_type=jnp.float32)
                    + b_ref[...]).astype(out_ref.dtype)


def conv1x1_nhwc(x_nhwc, w, b, *, tm=256):
    """x_nhwc: [B,H,W,Cin]; w: [Cin,Cout]; b: [Cout] -> [B,H,W,Cout]."""
    B, H, W, Cin = x_nhwc.shape
    Cout = w.shape[1]
    N = B * H * W
    tm_eff = _pick_tile(N, tm)
    n_pad = _round_up(N, tm_eff)
    x2 = x_nhwc.reshape(N, Cin)
    if n_pad != N:
        x2 = jnp.pad(x2, ((0, n_pad - N), (0, 0)))

    out = pl.pallas_call(
        _conv1x1_kernel,
        out_shape=jax.ShapeDtypeStruct((n_pad, Cout), x_nhwc.dtype),
        grid_spec=pltpu.PrefetchScalarGridSpec(
            num_scalar_prefetch=0,
            grid=(n_pad // tm_eff,),
            in_specs=[
                pl.BlockSpec((tm_eff, Cin), lambda i: (i, 0)),
                pl.BlockSpec((Cin, Cout), lambda i: (0, 0)),
                pl.BlockSpec((1, Cout), lambda i: (0, 0)),
            ],
            out_specs=pl.BlockSpec((tm_eff, Cout), lambda i: (i, 0)),
        ),
        compiler_params=pltpu.CompilerParams(
            dimension_semantics=("parallel",),
            vmem_limit_bytes=_VMEM_LIMIT),
    )(x2.astype(_COMPUTE_DTYPE), w.astype(_COMPUTE_DTYPE),
      b.reshape(1, -1).astype(jnp.float32))
    if n_pad != N:
        out = out[:N]
    return out.reshape(B, H, W, Cout)


def conv1x1_nchw(x_nchw, w, b, *, tm=256):
    """Compatibility shim for the PyTorch NCHW Conv2d.  In a real pipeline the
    NCHW<->NHWC transposes should be fused into the producer/consumer — they
    move more bytes than the 1x1-conv matmul itself."""
    x_nhwc = jnp.transpose(x_nchw, (0, 2, 3, 1))
    out = conv1x1_nhwc(x_nhwc, w, b, tm=tm)
    return jnp.transpose(out, (0, 3, 1, 2))


# ----------------------------------------------------------------------------
# Deterministic parameter construction (torch nn.Linear-style shapes)
# ----------------------------------------------------------------------------
def _uniform(key, shape, bound):
    return jax.random.uniform(key, shape, jnp.float32, minval=-bound, maxval=bound)


def _as_f32(a):   # bf16 round-trip, so references match the kernels' inputs
    return a.astype(_COMPUTE_DTYPE).astype(jnp.float32)


if __name__ == "__main__":
    key = jax.random.PRNGKey(0)

    # ---- small shapes consistent with the module ----
    B, H, W = 2, 8, 8           # window-attention token grid
    dim = 32                    # qkv.in_features
    r = 4                       # LoRA rank
    td = 32                     # transformer_dim (mask decoder); td//8 = 4

    keys = jax.random.split(key, 32)
    ki = iter(keys)

    # frozen qkv linear: weight [3*dim, dim], bias [3*dim]  (torch layout)
    wqkv = _uniform(next(ki), (3 * dim, dim), 1.0 / math.sqrt(dim))
    bqkv = _uniform(next(ki), (3 * dim,), 1.0 / math.sqrt(dim))

    # LoRA adapters: 3 (A,B) pairs for q and for v.
    # NOTE: the module's reset_parameters() zero-inits the B matrices; we use
    # small nonzero deterministic values so the LoRA compute path is exercised
    # (the kernel's semantics are identical either way).
    kaiming = 1.0 / math.sqrt(dim)          # kaiming_uniform(a=sqrt(5)) bound
    aq = jnp.stack([_uniform(next(ki), (r, dim), kaiming) for _ in range(3)])   # [3,r,dim]
    av = jnp.stack([_uniform(next(ki), (r, dim), kaiming) for _ in range(3)])
    bq = jnp.stack([_uniform(next(ki), (dim, r), 0.02) for _ in range(3)])      # [3,dim,r]
    bv = jnp.stack([_uniform(next(ki), (dim, r), 0.02) for _ in range(3)])

    # transpose torch [out,in] -> kernel [in,out]
    wqkv_t = wqkv.T                                  # [dim, 3*dim]
    aq_t = jnp.transpose(aq, (0, 2, 1))              # [3, dim, r]
    av_t = jnp.transpose(av, (0, 2, 1))
    bq_t = jnp.transpose(bq, (0, 2, 1))              # [3, r, dim]
    bv_t = jnp.transpose(bv, (0, 2, 1))

    x = jax.random.normal(next(ki), (B, H, W, dim), jnp.float32)

    # ---- run LoRA-qkv kernel ----
    out_qkv = jax.block_until_ready(lora_qkv(x, wqkv_t, bqkv, aq_t, bq_t, av_t, bv_t))

    # reference (pure JAX, mirrors _LoRA_qkv.forward; bf16-cast inputs, f32 math)
    xf = _as_f32(x.reshape(-1, dim))
    ref = xf @ _as_f32(wqkv_t) + bqkv
    lq = sum((xf @ _as_f32(aq_t[i])) @ _as_f32(bq_t[i]) for i in range(3))
    lv = sum((xf @ _as_f32(av_t[i])) @ _as_f32(bv_t[i]) for i in range(3))
    ref = ref.at[:, :dim].add(lq).at[:, 2 * dim:].add(lv).reshape(B, H, W, 3 * dim)
    assert jnp.allclose(out_qkv, ref, atol=2e-2, rtol=2e-2), "LoRA qkv mismatch"

    # ---- mlp_src: MLP(td, td//8, td//8, num_layers=3) on [N, td] tokens ----
    hsz = td // 8
    w1 = _uniform(next(ki), (hsz, td), 1.0 / math.sqrt(td)).T
    b1 = _uniform(next(ki), (hsz,), 1.0 / math.sqrt(td))
    w2 = _uniform(next(ki), (hsz, hsz), 1.0 / math.sqrt(hsz)).T
    b2 = _uniform(next(ki), (hsz,), 1.0 / math.sqrt(hsz))
    w3 = _uniform(next(ki), (hsz, hsz), 1.0 / math.sqrt(hsz)).T
    b3 = _uniform(next(ki), (hsz,), 1.0 / math.sqrt(hsz))
    src = jax.random.normal(next(ki), (128, td), jnp.float32)

    out_mlp = jax.block_until_ready(mlp3(src, w1, b1, w2, b2, w3, b3))
    h_ref = jnp.maximum(_as_f32(src) @ _as_f32(w1) + b1, 0.0)
    h_ref = jnp.maximum(h_ref @ _as_f32(w2) + b2, 0.0)
    mlp_ref = h_ref @ _as_f32(w3) + b3
    assert jnp.allclose(out_mlp, mlp_ref, atol=2e-2, rtol=2e-2), "MLP mismatch"

    # ---- linear_fuse: 1x1 conv, kept NHWC end-to-end ----
    cin, cout = 3 * hsz, hsz
    wf = _uniform(next(ki), (cout, cin), 1.0 / math.sqrt(cin)).T   # [Cin, Cout]
    bf = _uniform(next(ki), (cout,), 1.0 / math.sqrt(cin))
    feat_nhwc = jax.random.normal(next(ki), (B, H, W, cin), jnp.float32)

    out_fuse = jax.block_until_ready(conv1x1_nhwc(feat_nhwc, wf, bf))
    fuse_ref = jnp.einsum("bhwc,co->bhwo", _as_f32(feat_nhwc), _as_f32(wf)) + bf
    assert jnp.allclose(out_fuse, fuse_ref, atol=2e-2, rtol=2e-2), "fuse mismatch"

    # NCHW compatibility shim (PyTorch Conv2d layout)
    out_fuse_nchw = jax.block_until_ready(
        conv1x1_nchw(jnp.transpose(feat_nhwc, (0, 3, 1, 2)), wf, bf))
    assert jnp.allclose(out_fuse_nchw, jnp.transpose(fuse_ref, (0, 3, 1, 2)),
                        atol=2e-2, rtol=2e-2), "fuse (NCHW shim) mismatch"

    # TODO(synk): LoRA_Sam.forward also runs the full SAM2 Hiera image encoder,
    # SAM mask decoder (_forward_sam_heads) and a CLIP text encoder — external
    # pretrained models with no self-contained Pallas equivalent here.

    print("KERNEL_OK")
</pallas_src>

<mosaic_0001>
module attributes {stable_mosaic.version = 11 : i64} {
  func.func @_lora_qkv_kernel(%arg0: i32, %arg1: memref<128x32xbf16, #tpu.memory_space<vmem>>, %arg2: memref<32x96xbf16, #tpu.memory_space<vmem>>, %arg3: memref<1x96xf32, #tpu.memory_space<vmem>>, %arg4: memref<32x24xbf16, #tpu.memory_space<vmem>>, %arg5: memref<24x96xbf16, #tpu.memory_space<vmem>>, %arg6: memref<128x96xf32, #tpu.memory_space<vmem>>) attributes {dimension_semantics = [#tpu.dimension_semantics<parallel>], iteration_bounds = array<i64: 1>, scalar_prefetch = 0 : i64, scratch_operands = 0 : i64, tpu.core_type = #tpu.core_type<tc>, window_params = [{transform_indices = @transform_0, window_bounds = array<i64: 128, 32>}, {pipeline_mode = #tpu.pipeline_mode<synchronous>, transform_indices = @transform_1, window_bounds = array<i64: 32, 96>}, {pipeline_mode = #tpu.pipeline_mode<synchronous>, transform_indices = @transform_2, window_bounds = array<i64: 1, 96>}, {pipeline_mode = #tpu.pipeline_mode<synchronous>, transform_indices = @transform_3, window_bounds = array<i64: 32, 24>}, {pipeline_mode = #tpu.pipeline_mode<synchronous>, transform_indices = @transform_4, window_bounds = array<i64: 24, 96>}, {transform_indices = @transform_5, window_bounds = array<i64: 128, 96>}]} {
    %c0 = arith.constant 0 : index
    %c0_0 = arith.constant 0 : index
    %0 = vector.load %arg1[%c0, %c0_0] : memref<128x32xbf16, #tpu.memory_space<vmem>>, vector<128x32xbf16>
    %c0_1 = arith.constant 0 : index
    %c0_2 = arith.constant 0 : index
    %1 = vector.load %arg2[%c0_1, %c0_2] : memref<32x96xbf16, #tpu.memory_space<vmem>>, vector<32x96xbf16>
    %cst = arith.constant dense<0.000000e+00> : vector<128x96xf32>
    %2 = tpu.matmul %0, %1, %cst {dimension_numbers = #tpu.dot_dimension_numbers<[1], [0], [0], [1], [0, 0, 1, 1], [], []>} : vector<128x32xbf16>, vector<32x96xbf16>, vector<128x96xf32> -> vector<128x96xf32>
    %c0_3 = arith.constant 0 : index
    %c0_4 = arith.constant 0 : index
    %3 = vector.load %arg4[%c0_3, %c0_4] : memref<32x24xbf16, #tpu.memory_space<vmem>>, vector<32x24xbf16>
    %cst_5 = arith.constant dense<0.000000e+00> : vector<128x24xf32>
    %4 = tpu.matmul %0, %3, %cst_5 {dimension_numbers = #tpu.dot_dimension_numbers<[1], [0], [0], [1], [0, 0, 1, 1], [], []>} : vector<128x32xbf16>, vector<32x24xbf16>, vector<128x24xf32> -> vector<128x24xf32>
    %5 = arith.truncf %4 : vector<128x24xf32> to vector<128x24xbf16>
    %c0_6 = arith.constant 0 : index
    %c0_7 = arith.constant 0 : index
    %6 = vector.load %arg5[%c0_6, %c0_7] : memref<24x96xbf16, #tpu.memory_space<vmem>>, vector<24x96xbf16>
    %cst_8 = arith.constant dense<0.000000e+00> : vector<128x96xf32>
    %7 = tpu.matmul %5, %6, %cst_8 {dimension_numbers = #tpu.dot_dimension_numbers<[1], [0], [0], [1], [0, 0, 1, 1], [], []>} : vector<128x24xbf16>, vector<24x96xbf16>, vector<128x96xf32> -> vector<128x96xf32>
    %8 = arith.addf %2, %7 : vector<128x96xf32>
    %c0_9 = arith.constant 0 : index
    %c0_10 = arith.constant 0 : index
    %9 = vector.load %arg3[%c0_9, %c0_10] : memref<1x96xf32, #tpu.memory_space<vmem>>, vector<1x96xf32>
    %10 = vector.broadcast %9 : vector<1x96xf32> to vector<128x96xf32>
    %11 = arith.addf %8, %10 : vector<128x96xf32>
    %c0_11 = arith.constant 0 : index
    %c0_12 = arith.constant 0 : index
    %12 = vector.load %arg6[%c0_11, %c0_12] : memref<128x96xf32, #tpu.memory_space<vmem>>, vector<128x96xf32>
    tpu.vector_store %arg6[%c0_11, %c0_12], %11 {strides = array<i32>} : memref<128x96xf32, #tpu.memory_space<vmem>>, vector<128x96xf32>,
    return
  }
  func.func @transform_0(%arg0: i32) -> (i32, i32) {
    %c0_i32 = arith.constant 0 : i32
    %c0_i32_0 = arith.constant 0 : i32
    return %arg0, %c0_i32 : i32, i32
  }
  func.func @transform_1(%arg0: i32) -> (i32, i32) {
    %c0_i32 = arith.constant 0 : i32
    %c0_i32_0 = arith.constant 0 : i32
    %c0_i32_1 = arith.constant 0 : i32
    return %c0_i32, %c0_i32_0 : i32, i32
  }
  func.func @transform_2(%arg0: i32) -> (i32, i32) {
    %c0_i32 = arith.constant 0 : i32
    %c0_i32_0 = arith.constant 0 : i32
    %c0_i32_1 = arith.constant 0 : i32
    return %c0_i32, %c0_i32_0 : i32, i32
  }
  func.func @transform_3(%arg0: i32) -> (i32, i32) {
    %c0_i32 = arith.constant 0 : i32
    %c0_i32_0 = arith.constant 0 : i32
    %c0_i32_1 = arith.constant 0 : i32
    return %c0_i32, %c0_i32_0 : i32, i32
  }
  func.func @transform_4(%arg0: i32) -> (i32, i32) {
    %c0_i32 = arith.constant 0 : i32
    %c0_i32_0 = arith.constant 0 : i32
    %c0_i32_1 = arith.constant 0 : i32
    return %c0_i32, %c0_i32_0 : i32, i32
  }
  func.func @transform_5(%arg0: i32) -> (i32, i32) {
    %c0_i32 = arith.constant 0 : i32
    %c0_i32_0 = arith.constant 0 : i32
    return %arg0, %c0_i32 : i32, i32
  }
}

</mosaic_0001>

<llo_original>
// kernel: tpu_custom_call.1
$region0: #{tpu_custom_call.1}
  #allocation0 [shape = 'u32[]', space=smem, size = 0x4, offset = 0x4, fixed_abs, tag = 'smem constant byte address 0x4 - core index']
  #allocation1 [shape = 'u32[144,128]{1,0:T(1,128)}', space=vmem, size = 0x12000, scoped, tag = 'internal scratch']
  %s0 = inlined_call_operand.vmem [shape: bf16[128,32], index: 0, kind: input, shape index: {}]
  %s1 = inlined_call_operand.vmem [shape: bf16[32,96], index: 1, kind: input, shape index: {}]
  %s2 = inlined_call_operand.vmem [shape: f32[1,96], index: 2, kind: input, shape index: {}]
  %s3 = inlined_call_operand.vmem [shape: bf16[32,24], index: 3, kind: input, shape index: {}]
  %s4 = inlined_call_operand.vmem [shape: bf16[24,96], index: 4, kind: input, shape index: {}]
  %s5 = inlined_call_operand.vmem [shape: f32[128,96], index: 5, kind: output, shape index: {}]
  %s6 = sld [smem:[#allocation0]]
  $region30: #{tpu_custom_call.1} parent=0
    _
  %s8 = ssub.s32 1, %s6
  %s9 = scalar_select 0, %s8, %s6
  // Predicated region
  $region2: #{tpu_custom_call.1} parent=0 // pred_check
    _
  $region3: #{tpu_custom_call.1} parent=0 // pred_check_branch
    %11 = sbr.rel (0) target = $region5
  $region4: #{tpu_custom_call.1} parent=0 // pred_region
    _
  $region5: #{tpu_custom_call.1} parent=0 // pred_fallthru
    _
  // Predicated region
  $region6: #{tpu_custom_call.1} parent=0 // pred_check
    _
  $region7: #{tpu_custom_call.1} parent=0 // pred_check_branch
    %13 = sbr.rel (0) target = $region9
  $region8: #{tpu_custom_call.1} parent=0 // pred_region
    _
  $region9: #{tpu_custom_call.1} parent=0 // pred_fallthru
    _
  // Predicated region
  $region10: #{tpu_custom_call.1} parent=0 // pred_check
    _
  $region11: #{tpu_custom_call.1} parent=0 // pred_check_branch
    %15 = sbr.rel (0) target = $region13
  $region12: #{tpu_custom_call.1} parent=0 // pred_region
    _
  $region13: #{tpu_custom_call.1} parent=0 // pred_fallthru
    _
  // Predicated region
  $region14: #{tpu_custom_call.1} parent=0 // pred_check
    _
  $region15: #{tpu_custom_call.1} parent=0 // pred_check_branch
    %17 = sbr.rel (0) target = $region17
  $region16: #{tpu_custom_call.1} parent=0 // pred_region
    _
  $region17: #{tpu_custom_call.1} parent=0 // pred_fallthru
    _
  // Predicated region
  $region18: #{tpu_custom_call.1} parent=0 // pred_check
    _
  $region19: #{tpu_custom_call.1} parent=0 // pred_check_branch
    %19 = sbr.rel (0) target = $region21
  $region20: #{tpu_custom_call.1} parent=0 // pred_region
    _
  $region21: #{tpu_custom_call.1} parent=0 // pred_fallthru
    _
  %v21 = vld [vmem:[%s0] sm:$0xf]
  %v22 = vld [vmem:[%s0 + $0x4] sm:$0xf]
  %v23 = vld [vmem:[%s0 + $0x8] sm:$0xf]
  %v24 = vld [vmem:[%s0 + $0xc] sm:$0xf]
  %v25 = vld [vmem:[%s0 + $0x10] sm:$0xf]
  %v26 = vld [vmem:[%s0 + $0x14] sm:$0xf]
  %v27 = vld [vmem:[%s0 + $0x18] sm:$0xf]
  %v28 = vld [vmem:[%s0 + $0x1c] sm:$0xf]
  %v29 = vld [vmem:[%s0 + $0x20] sm:$0xf]
  %v30 = vld [vmem:[%s0 + $0x24] sm:$0xf]
  %v31 = vld [vmem:[%s0 + $0x28] sm:$0xf]
  %v32 = vld [vmem:[%s0 + $0x2c] sm:$0xf]
  %v33 = vld [vmem:[%s0 + $0x30] sm:$0xf]
  %v34 = vld [vmem:[%s0 + $0x34] sm:$0xf]
  %v35 = vld [vmem:[%s0 + $0x38] sm:$0xf]
  %v36 = vld [vmem:[%s0 + $0x3c] sm:$0xf]
  %v37 = vld [vmem:[%s1] sm:$0xf]
  %v38 = vld [vmem:[%s1 + $0x4] sm:$0xf]
  %v39 = vld [vmem:[%s1 + $0x8] sm:$0xf]
  %v40 = vld [vmem:[%s1 + $0xc] sm:$0xf]
  %v41 = vld [vmem:[%s3] sm:$0xf]
  %v42 = vld [vmem:[%s3 + $0x4] sm:$0xf]
  %v43 = vld [vmem:[%s3 + $0x8] sm:$0xf]
  %v44 = vld [vmem:[%s3 + $0xc] sm:$0xf]
  %v61 = vunpack.c.l.b16 %v21
  %v62 = vunpack.c.l.b16 %v22
  %v63 = vunpack.c.l.b16 %v23
  %v64 = vunpack.c.l.b16 %v24
  %v65 = vunpack.c.l.b16 %v25
  %v66 = vunpack.c.l.b16 %v26
  %v67 = vunpack.c.l.b16 %v27
  %v68 = vunpack.c.l.b16 %v28
  %v69 = vunpack.c.l.b16 %v29
  %v70 = vunpack.c.l.b16 %v30
  %v71 = vunpack.c.l.b16 %v31
  %v72 = vunpack.c.l.b16 %v32
  %v73 = vunpack.c.l.b16 %v33
  %v74 = vunpack.c.l.b16 %v34
  %v75 = vunpack.c.l.b16 %v35
  %v76 = vunpack.c.l.b16 %v36
  %v77 = vpack.c.b16 %v62, %v61
  %v78 = vpack.c.b16 %v64, %v63
  %v79 = vpack.c.b16 %v66, %v65
  %v80 = vpack.c.b16 %v68, %v67
  %v81 = vpack.c.b16 %v70, %v69
  %v82 = vpack.c.b16 %v72, %v71
  %v83 = vpack.c.b16 %v74, %v73
  %v84 = vpack.c.b16 %v76, %v75
  %v89 = vunpack.c.l.b16 %v41
  %v90 = vunpack.c.l.b16 %v42
  %v91 = vunpack.c.l.b16 %v43
  %v92 = vunpack.c.l.b16 %v44
  %v93 = vpack.c.b16 %v90, %v89
  %v94 = vpack.c.b16 %v92, %v91
  %vm97 = vcmask 261120
  %v99 = vsel %vm97, %v77, 0
  %v102 = vsel %vm97, %v78, 0
  %v105 = vsel %vm97, %v79, 0
  %v108 = vsel %vm97, %v80, 0
  %v111 = vsel %vm97, %v81, 0
  %v114 = vsel %vm97, %v82, 0
  %v117 = vsel %vm97, %v83, 0
  %v120 = vsel %vm97, %v84, 0
  %122 = vmatprep.subr.bf16.mxu0 0
  %123 = vmatpush1.bf16.msra.mxu0 %v93
  %124 = vmatprep.subr.bf16.mxu0 0
  %125 = vmatpush1.bf16.msra.mxu0 %v94
  %126 = vmatprep.subr.bf16.mxu0 0
  %127 = vmatpush1.bf16.msra.mxu0 0
  %128 = vmatprep.subr.bf16.mxu0 0
  %129 = vmatpush1.bf16.msra.mxu0 0
  %130 = vmatprep.subr.bf16.mxu0 0
  %131 = vmatpush1.bf16.msra.mxu0 0
  %132 = vmatprep.subr.bf16.mxu0 0
  %133 = vmatpush1.bf16.msra.mxu0 0
  %134 = vmatprep.subr.bf16.mxu0 0
  %135 = vmatpush1.bf16.msra.mxu0 0
  %136 = vmatprep.subr.bf16.mxu0 0
  %137 = vmatpush1.bf16.msra.mxu0 0
  %138 = vmatprep.subr.bf16.mxu0 0
  %139 = vmatpush1.bf16.msra.mxu0 0
  %140 = vmatprep.subr.bf16.mxu0 0
  %141 = vmatpush1.bf16.msra.mxu0 0
  %142 = vmatprep.subr.bf16.mxu0 0
  %143 = vmatpush1.bf16.msra.mxu0 0
  %144 = vmatprep.subr.bf16.mxu0 0
  %145 = vmatpush1.bf16.msra.mxu0 0
  %146 = vmatprep.subr.bf16.mxu0 0
  %147 = vmatpush1.bf16.msra.mxu0 0
  %148 = vmatprep.subr.bf16.mxu0 0
  %149 = vmatpush1.bf16.msra.mxu0 0
  %150 = vmatprep.subr.bf16.mxu0 0
  %151 = vmatpush1.bf16.msra.mxu0 0
  %152 = vmatprep.subr.bf16.mxu0 0
  %153 = vmatpush1.bf16.msra.mxu0 0
  %154 = vmatprep.mubr.bf16.mxu0 0
  %155 = vmatmul.mubr.bf16.gmra.mrb[0].mxu0 %v99
  %v156 = vpop.f32.mrb[0].mxu0
  %v157 = vadd.f32 0.0, %v156
  %v158 = vpop.f32.mrb[0].mxu0
  %v159 = vpop.f32.mrb[0].mxu0
  %v160 = vadd.f32 0.0, %v159
  %v161 = vpop.f32.mrb[0].mxu0
  %162 = vmatprep.mubr.bf16.mxu0 0
  %163 = vmatmul.mubr.bf16.gmra.mrb[0].mxu0 %v102
  %v164 = vpop.f32.mrb[0].mxu0
  %v165 = vadd.f32 0.0, %v164
  %v166 = vpop.f32.mrb[0].mxu0
  %v167 = vpop.f32.mrb[0].mxu0
  %v168 = vadd.f32 0.0, %v167
  %v169 = vpop.f32.mrb[0].mxu0
  %170 = vmatprep.mubr.bf16.mxu0 0
  %171 = vmatmul.mubr.bf16.gmra.mrb[0].mxu0 %v105
  %v172 = vpop.f32.mrb[0].mxu0
  %v173 = vadd.f32 0.0, %v172
  %v174 = vpop.f32.mrb[0].mxu0
  %v175 = vpop.f32.mrb[0].mxu0
  %v176 = vadd.f32 0.0, %v175
  %v177 = vpop.f32.mrb[0].mxu0
  %178 = vmatprep.mubr.bf16.mxu0 0
  %179 = vmatmul.mubr.bf16.gmra.mrb[0].mxu0 %v108
  %v180 = vpop.f32.mrb[0].mxu0
  %v181 = vadd.f32 0.0, %v180
  %v182 = vpop.f32.mrb[0].mxu0
  %v183 = vpop.f32.mrb[0].mxu0
  %v184 = vadd.f32 0.0, %v183
  %v185 = vpop.f32.mrb[0].mxu0
  %186 = vmatprep.mubr.bf16.mxu0 0
  %187 = vmatmul.mubr.bf16.gmra.mrb[0].mxu0 %v111
  %v188 = vpop.f32.mrb[0].mxu0
  %v189 = vadd.f32 0.0, %v188
  %v190 = vpop.f32.mrb[0].mxu0
  %v191 = vpop.f32.mrb[0].mxu0
  %v192 = vadd.f32 0.0, %v191
  %v193 = vpop.f32.mrb[0].mxu0
  %194 = vmatprep.mubr.bf16.mxu0 0
  %195 = vmatmul.mubr.bf16.gmra.mrb[0].mxu0 %v114
  %v196 = vpop.f32.mrb[0].mxu0
  %v197 = vadd.f32 0.0, %v196
  %v198 = vpop.f32.mrb[0].mxu0
  %v199 = vpop.f32.mrb[0].mxu0
  %v200 = vadd.f32 0.0, %v199
  %v201 = vpop.f32.mrb[0].mxu0
  %202 = vmatprep.mubr.bf16.mxu0 0
  %203 = vmatmul.mubr.bf16.gmra.mrb[0].mxu0 %v117
  %v204 = vpop.f32.mrb[0].mxu0
  %v205 = vadd.f32 0.0, %v204
  %v206 = vpop.f32.mrb[0].mxu0
  %v207 = vpop.f32.mrb[0].mxu0
  %v208 = vadd.f32 0.0, %v207
  %v209 = vpop.f32.mrb[0].mxu0
  %210 = vmatprep.mubr.bf16.mxu0 0
  %211 = vmatmul.mubr.bf16.gmra.mrb[0].mxu0 %v120
  %v212 = vpop.f32.mrb[0].mxu0
  %v213 = vadd.f32 0.0, %v212
  %v214 = vpop.f32.mrb[0].mxu0
  %v215 = vpop.f32.mrb[0].mxu0
  %v216 = vadd.f32 0.0, %v215
  %v217 = vpop.f32.mrb[0].mxu0
  %218 = vdwg.mxu0
  %v219 = vpack.c.bf16 %v160, %v157
  %v220 = vpack.c.bf16 %v168, %v165
  %v221 = vpack.c.bf16 %v176, %v173
  %v222 = vpack.c.bf16 %v184, %v181
  %v223 = vpack.c.bf16 %v192, %v189
  %v224 = vpack.c.bf16 %v200, %v197
  %v225 = vpack.c.bf16 %v208, %v205
  %v226 = vpack.c.bf16 %v216, %v213
  %v227 = vld [vmem:[%s4] sm:$0xf]
  %v228 = vld [vmem:[%s4 + $0x4] sm:$0xf]
  %v229 = vld [vmem:[%s4 + $0x8] sm:$0xf]
  %v233 = vunpack.c.l.b16 %v227
  %v234 = vunpack.c.l.b16 %v228
  %v235 = vunpack.c.l.b16 %v229
  %v236 = vpack.c.b16 %v234, %v233
  %v237 = vpack.c.b16 %v235, %v235
  %vm239 = vcmask 195584
  %v241 = vsel %vm239, %v219, 0
  %v244 = vsel %vm239, %v220, 0
  %v247 = vsel %vm239, %v221, 0
  %v250 = vsel %vm239, %v222, 0
  %v253 = vsel %vm239, %v223, 0
  %v256 = vsel %vm239, %v224, 0
  %v259 = vsel %vm239, %v225, 0
  %v262 = vsel %vm239, %v226, 0
  %vm264 = vcmask 1043456
  %v266 = vsel %vm264, %v237, 0
  %268 = vmatprep.subr.bf16.mxu0 0
  %269 = vmatpush1.bf16.msra.mxu0 %v236
  %270 = vmatprep.subr.bf16.mxu0 0
  %271 = vmatpush1.bf16.msra.mxu0 %v266
  %272 = vmatprep.subr.bf16.mxu0 0
  %273 = vmatpush1.bf16.msra.mxu0 0
  %274 = vmatprep.subr.bf16.mxu0 0
  %275 = vmatpush1.bf16.msra.mxu0 0
  %276 = vmatprep.subr.bf16.mxu0 0
  %277 = vmatpush1.bf16.msra.mxu0 0
  %278 = vmatprep.subr.bf16.mxu0 0
  %279 = vmatpush1.bf16.msra.mxu0 0
  %280 = vmatprep.subr.bf16.mxu0 0
  %281 = vmatpush1.bf16.msra.mxu0 0
  %282 = vmatprep.subr.bf16.mxu0 0
  %283 = vmatpush1.bf16.msra.mxu0 0
  %284 = vmatprep.subr.bf16.mxu0 0
  %285 = vmatpush1.bf16.msra.mxu0 0
  %286 = vmatprep.subr.bf16.mxu0 0
  %287 = vmatpush1.bf16.msra.mxu0 0
  %288 = vmatprep.subr.bf16.mxu0 0
  %289 = vmatpush1.bf16.msra.mxu0 0
  %290 = vmatprep.subr.bf16.mxu0 0
  %291 = vmatpush1.bf16.msra.mxu0 0
  %292 = vmatprep.subr.bf16.mxu0 0
  %293 = vmatpush1.bf16.msra.mxu0 0
  %294 = vmatprep.subr.bf16.mxu0 0
  %295 = vmatpush1.bf16.msra.mxu0 0
  %296 = vmatprep.subr.bf16.mxu0 0
  %297 = vmatpush1.bf16.msra.mxu0 0
  %298 = vmatprep.subr.bf16.mxu0 0
  %299 = vmatpush1.bf16.msra.mxu0 0
  %300 = vmatprep.mubr.bf16.mxu0 0
  %301 = vmatmul.mubr.bf16.gmra.mrb[0].mxu0 %v241
  %v302 = vpop.f32.mrb[0].mxu0
  %v303 = vadd.f32 0.0, %v302
  %v304 = vpop.f32.mrb[0].mxu0
  %v305 = vpop.f32.mrb[0].mxu0
  %v306 = vadd.f32 0.0, %v305
  %v307 = vpop.f32.mrb[0].mxu0
  %308 = vmatprep.mubr.bf16.mxu0 0
  %309 = vmatmul.mubr.bf16.gmra.mrb[0].mxu0 %v244
  %v310 = vpop.f32.mrb[0].mxu0
  %v311 = vadd.f32 0.0, %v310
  %v312 = vpop.f32.mrb[0].mxu0
  %v313 = vpop.f32.mrb[0].mxu0
  %v314 = vadd.f32 0.0, %v313
  %v315 = vpop.f32.mrb[0].mxu0
  %316 = vmatprep.mubr.bf16.mxu0 0
  %317 = vmatmul.mubr.bf16.gmra.mrb[0].mxu0 %v247
  %v318 = vpop.f32.mrb[0].mxu0
  %v319 = vadd.f32 0.0, %v318
  %v320 = vpop.f32.mrb[0].mxu0
  %v321 = vpop.f32.mrb[0].mxu0
  %v322 = vadd.f32 0.0, %v321
  %v323 = vpop.f32.mrb[0].mxu0
  %324 = vmatprep.mubr.bf16.mxu0 0
  %325 = vmatmul.mubr.bf16.gmra.mrb[0].mxu0 %v250
  %v326 = vpop.f32.mrb[0].mxu0
  %v327 = vadd.f32 0.0, %v326
  %v328 = vpop.f32.mrb[0].mxu0
  %v329 = vpop.f32.mrb[0].mxu0
  %v330 = vadd.f32 0.0, %v329
  %v331 = vpop.f32.mrb[0].mxu0
  %332 = vmatprep.mubr.bf16.mxu0 0
  %333 = vmatmul.mubr.bf16.gmra.mrb[0].mxu0 %v253
  %v334 = vpop.f32.mrb[0].mxu0
  %v335 = vadd.f32 0.0, %v334
  %v336 = vpop.f32.mrb[0].mxu0
  %v337 = vpop.f32.mrb[0].mxu0
  %v338 = vadd.f32 0.0, %v337
  %v339 = vpop.f32.mrb[0].mxu0
  %340 = vmatprep.mubr.bf16.mxu0 0
  %341 = vmatmul.mubr.bf16.gmra.mrb[0].mxu0 %v256
  %v342 = vpop.f32.mrb[0].mxu0
  %v343 = vadd.f32 0.0, %v342
  %v344 = vpop.f32.mrb[0].mxu0
  %v345 = vpop.f32.mrb[0].mxu0
  %v346 = vadd.f32 0.0, %v345
  %v347 = vpop.f32.mrb[0].mxu0
  %348 = vmatprep.mubr.bf16.mxu0 0
  %349 = vmatmul.mubr.bf16.gmra.mrb[0].mxu0 %v259
  %v350 = vpop.f32.mrb[0].mxu0
  %v351 = vadd.f32 0.0, %v350
  %v352 = vpop.f32.mrb[0].mxu0
  %v353 = vpop.f32.mrb[0].mxu0
  %v354 = vadd.f32 0.0, %v353
  %v355 = vpop.f32.mrb[0].mxu0
  %356 = vmatprep.mubr.bf16.mxu0 0
  %357 = vmatmul.mubr.bf16.gmra.mrb[0].mxu0 %v262
  %v358 = vpop.f32.mrb[0].mxu0
  %v359 = vadd.f32 0.0, %v358
  %v360 = vpop.f32.mrb[0].mxu0
  %v361 = vpop.f32.mrb[0].mxu0
  %v362 = vadd.f32 0.0, %v361
  %v363 = vpop.f32.mrb[0].mxu0
  %364 = vdwg.mxu0
  %v369 = vunpack.c.l.b16 %v37
  %v370 = vunpack.c.l.b16 %v38
  %v371 = vunpack.c.l.b16 %v39
  %v372 = vunpack.c.l.b16 %v40
  %v373 = vpack.c.b16 %v370, %v369
  %v374 = vpack.c.b16 %v372, %v371
  %377 = vmatprep.subr.bf16.mxu0 0
  %378 = vmatpush1.bf16.msra.mxu0 %v373
  %379 = vmatprep.subr.bf16.mxu0 0
  %380 = vmatpush1.bf16.msra.mxu0 %v374
  %381 = vmatprep.subr.bf16.mxu0 0
  %382 = vmatpush1.bf16.msra.mxu0 0
  %383 = vmatprep.subr.bf16.mxu0 0
  %384 = vmatpush1.bf16.msra.mxu0 0
  %385 = vmatprep.subr.bf16.mxu0 0
  %386 = vmatpush1.bf16.msra.mxu0 0
  %387 = vmatprep.subr.bf16.mxu0 0
  %388 = vmatpush1.bf16.msra.mxu0 0
  %389 = vmatprep.subr.bf16.mxu0 0
  %390 = vmatpush1.bf16.msra.mxu0 0
  %391 = vmatprep.subr.bf16.mxu0 0
  %392 = vmatpush1.bf16.msra.mxu0 0
  %393 = vmatprep.subr.bf16.mxu0 0
  %394 = vmatpush1.bf16.msra.mxu0 0
  %395 = vmatprep.subr.bf16.mxu0 0
  %396 = vmatpush1.bf16.msra.mxu0 0
  %397 = vmatprep.subr.bf16.mxu0 0
  %398 = vmatpush1.bf16.msra.mxu0 0
  %399 = vmatprep.subr.bf16.mxu0 0
  %400 = vmatpush1.bf16.msra.mxu0 0
  %401 = vmatprep.subr.bf16.mxu0 0
  %402 = vmatpush1.bf16.msra.mxu0 0
  %403 = vmatprep.subr.bf16.mxu0 0
  %404 = vmatpush1.bf16.msra.mxu0 0
  %405 = vmatprep.subr.bf16.mxu0 0
  %406 = vmatpush1.bf16.msra.mxu0 0
  %407 = vmatprep.subr.bf16.mxu0 0
  %408 = vmatpush1.bf16.msra.mxu0 0
  %409 = vmatprep.mubr.bf16.mxu0 0
  %410 = vmatmul.mubr.bf16.gmra.mrb[0].mxu0 %v99
  %v411 = vpop.f32.mrb[0].mxu0
  %v412 = vadd.f32 %v303, %v411
  %v413 = vpop.f32.mrb[0].mxu0
  %v414 = vpop.f32.mrb[0].mxu0
  %v415 = vadd.f32 %v306, %v414
  %v416 = vpop.f32.mrb[0].mxu0
  %417 = vmatprep.mubr.bf16.mxu0 0
  %418 = vmatmul.mubr.bf16.gmra.mrb[0].mxu0 %v102
  %v419 = vpop.f32.mrb[0].mxu0
  %v420 = vadd.f32 %v311, %v419
  %v421 = vpop.f32.mrb[0].mxu0
  %v422 = vpop.f32.mrb[0].mxu0
  %v423 = vadd.f32 %v314, %v422
  %v424 = vpop.f32.mrb[0].mxu0
  %425 = vmatprep.mubr.bf16.mxu0 0
  %426 = vmatmul.mubr.bf16.gmra.mrb[0].mxu0 %v105
  %v427 = vpop.f32.mrb[0].mxu0
  %v428 = vadd.f32 %v319, %v427
  %v429 = vpop.f32.mrb[0].mxu0
  %v430 = vpop.f32.mrb[0].mxu0
  %v431 = vadd.f32 %v322, %v430
  %v432 = vpop.f32.mrb[0].mxu0
  %433 = vmatprep.mubr.bf16.mxu0 0
  %434 = vmatmul.mubr.bf16.gmra.mrb[0].mxu0 %v108
  %v435 = vpop.f32.mrb[0].mxu0
  %v436 = vadd.f32 %v327, %v435
  %v437 = vpop.f32.mrb[0].mxu0
  %v438 = vpop.f32.mrb[0].mxu0
  %v439 = vadd.f32 %v330, %v438
  %v440 = vpop.f32.mrb[0].mxu0
  %441 = vmatprep.mubr.bf16.mxu0 0
  %442 = vmatmul.mubr.bf16.gmra.mrb[0].mxu0 %v111
  %v443 = vpop.f32.mrb[0].mxu0
  %v444 = vadd.f32 %v335, %v443
  %v445 = vpop.f32.mrb[0].mxu0
  %v446 = vpop.f32.mrb[0].mxu0
  %v447 = vadd.f32 %v338, %v446
  %v448 = vpop.f32.mrb[0].mxu0
  %449 = vmatprep.mubr.bf16.mxu0 0
  %450 = vmatmul.mubr.bf16.gmra.mrb[0].mxu0 %v114
  %v451 = vpop.f32.mrb[0].mxu0
  %v452 = vadd.f32 %v343, %v451
  %v453 = vpop.f32.mrb[0].mxu0
  %v454 = vpop.f32.mrb[0].mxu0
  %v455 = vadd.f32 %v346, %v454
  %v456 = vpop.f32.mrb[0].mxu0
  %457 = vmatprep.mubr.bf16.mxu0 0
  %458 = vmatmul.mubr.bf16.gmra.mrb[0].mxu0 %v117
  %v459 = vpop.f32.mrb[0].mxu0
  %v460 = vadd.f32 %v351, %v459
  %v461 = vpop.f32.mrb[0].mxu0
  %v462 = vpop.f32.mrb[0].mxu0
  %v463 = vadd.f32 %v354, %v462
  %v464 = vpop.f32.mrb[0].mxu0
  %465 = vmatprep.mubr.bf16.mxu0 0
  %466 = vmatmul.mubr.bf16.gmra.mrb[0].mxu0 %v120
  %v467 = vpop.f32.mrb[0].mxu0
  %v468 = vadd.f32 %v359, %v467
  %v469 = vpop.f32.mrb[0].mxu0
  %v470 = vpop.f32.mrb[0].mxu0
  %v471 = vadd.f32 %v362, %v470
  %v472 = vpop.f32.mrb[0].mxu0
  %473 = vdwg.mxu0
  %v474 = vld [vmem:[%s2] sm:$0x1]
  %v476 = vlaneseq
  %v477 = vshrl.u32 %v476, 7
  %v478 = vsub.s32 0, %v477
  %v479 = vrot.slane %v474, %v478
  %v481 = vadd.f32 %v412, %v479
  %v482 = vadd.f32 %v415, %v479
  %v483 = vadd.f32 %v420, %v479
  %v484 = vadd.f32 %v423, %v479
  %v485 = vadd.f32 %v428, %v479
  %v486 = vadd.f32 %v431, %v479
  %v487 = vadd.f32 %v436, %v479
  %v488 = vadd.f32 %v439, %v479
  %v489 = vadd.f32 %v444, %v479
  %v490 = vadd.f32 %v447, %v479
  %v491 = vadd.f32 %v452, %v479
  %v492 = vadd.f32 %v455, %v479
  %v493 = vadd.f32 %v460, %v479
  %v494 = vadd.f32 %v463, %v479
  %v495 = vadd.f32 %v468, %v479
  %v496 = vadd.f32 %v471, %v479
  %vm497 = vcmask 785408
  %498 = vst.msk [vmem:[%s5] sm:$0xff] %vm497, %v481
  %499 = vst.msk [vmem:[%s5 + $0x8] sm:$0xff] %vm497, %v482
  %500 = vst.msk [vmem:[%s5 + $0x10] sm:$0xff] %vm497, %v483
  %501 = vst.msk [vmem:[%s5 + $0x18] sm:$0xff] %vm497, %v484
  %502 = vst.msk [vmem:[%s5 + $0x20] sm:$0xff] %vm497, %v485
  %503 = vst.msk [vmem:[%s5 + $0x28] sm:$0xff] %vm497, %v486
  %504 = vst.msk [vmem:[%s5 + $0x30] sm:$0xff] %vm497, %v487
  %505 = vst.msk [vmem:[%s5 + $0x38] sm:$0xff] %vm497, %v488
  %506 = vst.msk [vmem:[%s5 + $0x40] sm:$0xff] %vm497, %v489
  %507 = vst.msk [vmem:[%s5 + $0x48] sm:$0xff] %vm497, %v490
  %508 = vst.msk [vmem:[%s5 + $0x50] sm:$0xff] %vm497, %v491
  %509 = vst.msk [vmem:[%s5 + $0x58] sm:$0xff] %vm497, %v492
  %510 = vst.msk [vmem:[%s5 + $0x60] sm:$0xff] %vm497, %v493
  %511 = vst.msk [vmem:[%s5 + $0x68] sm:$0xff] %vm497, %v494
  %512 = vst.msk [vmem:[%s5 + $0x70] sm:$0xff] %vm497, %v495
  %513 = vst.msk [vmem:[%s5 + $0x78] sm:$0xff] %vm497, %v496
  // Predicated region
  $region22: #{tpu_custom_call.1} parent=0 // pred_check
    _
  $region23: #{tpu_custom_call.1} parent=0 // pred_check_branch
    %515 = sbr.rel (0) target = $region25
  $region24: #{tpu_custom_call.1} parent=0 // pred_region
    _
  $region25: #{tpu_custom_call.1} parent=0 // pred_fallthru
    _
  // Predicated region
  $region26: #{tpu_custom_call.1} parent=0 // pred_check
    _
  $region27: #{tpu_custom_call.1} parent=0 // pred_check_branch
    %517 = sbr.rel (0) target = $region29
  $region28: #{tpu_custom_call.1} parent=0 // pred_region
    _
  $region29: #{tpu_custom_call.1} parent=0 // pred_fallthru
    _

</llo_original>
